<compile_context>
chip_gen: v5e
topology: v5e:2x2
jax: 0.10.0
libtpu: 0.0.40
codegen_flags: <defaults>
</compile_context>

<pallas_src>
import functools

import jax
import jax.numpy as jnp
from jax.experimental import pallas as pl
from jax.experimental.pallas import tpu as pltpu

LANE = 128
# Target ~2 MiB of data per VMEM buffer (in + out, double-buffered => ~8 MiB).
TARGET_TILE_BYTES = 2 * 1024 * 1024
# Ragged fallback: cap the per-step column block (multiple of 128).
MAX_RAGGED_COLS = 8 * 1024


def _drop_path_kernel(keep_ref, x_ref, o_ref, *, scale: float):
    """One grid step == (one sample, one feature tile).

    keep_ref    : (n,) int32 keep flags in SMEM (scalar prefetch).
    x_ref/o_ref : current tile of that sample's features.
    """
    b = pl.program_id(0)
    factor = jnp.where(keep_ref[b] > 0, jnp.float32(scale), jnp.float32(0.0))
    # Multiply in the native dtype (bf16 stays bf16 on v6e/v7x VALUs).
    o_ref[...] = x_ref[...] * factor.astype(o_ref.dtype)


def drop_path_pallas(x, drop_prob: float = 0.0, training: bool = False,
                     scale_by_keep: bool = True, *, key=None, seed: int = 0):
    """Pallas equivalent of timm/ConvNeXt drop_path()."""
    if drop_prob == 0.0 or not training:
        return x
    keep_prob = 1.0 - drop_prob
    if key is None:
        key = jax.random.PRNGKey(seed)

    n = x.shape[0]
    # Per-sample Bernoulli: N scalars, trivially cheap in the wrapper.
    keep = jax.random.bernoulli(key, p=keep_prob, shape=(n,)).astype(jnp.int32)
    scale = (1.0 / keep_prob) if (scale_by_keep and keep_prob > 0.0) else 1.0

    flat = x.reshape(n, -1)
    total = flat.shape[1]
    itemsize = jnp.dtype(x.dtype).itemsize

    kernel = functools.partial(_drop_path_kernel, scale=scale)

    if total % LANE == 0:
        # Lane-dense 3D view (reshape is free; no pad / slice-back copies).
        m = total // LANE
        cap_rows = max(8, (TARGET_TILE_BYTES // (LANE * itemsize)) // 8 * 8)
        tm = m if m <= cap_rows else cap_rows   # == m (full) or multiple of 8
        x3 = flat.reshape(n, m, LANE)
        out = pl.pallas_call(
            kernel,
            out_shape=jax.ShapeDtypeStruct(x3.shape, x.dtype),
            grid_spec=pltpu.PrefetchScalarGridSpec(
                num_scalar_prefetch=1,
                grid=(n, pl.cdiv(m, tm)),
                in_specs=[pl.BlockSpec((1, tm, LANE),
                                       lambda b, j, keep_ref: (b, j, 0))],
                out_specs=pl.BlockSpec((1, tm, LANE),
                                       lambda b, j, keep_ref: (b, j, 0)),
            ),
            compiler_params=pltpu.CompilerParams(
                dimension_semantics=("parallel", "parallel")),
        )(keep, x3)
        return out.reshape(x.shape)

    # Ragged feature count: tile the feature axis (never pad + slice, which
    # would each cost a full extra HBM pass).  If the sample fits in one
    # block we use the full extent; otherwise 128-multiple blocks with a
    # Pallas-masked tail keep VMEM bounded for arbitrarily large samples.
    # TODO(synk): a (1, tc) block uses 1 sublane per (8,128) tile; repack to a
    # denser layout if the ragged path ever becomes hot.
    tc = total if total <= MAX_RAGGED_COLS else MAX_RAGGED_COLS
    out = pl.pallas_call(
        kernel,
        out_shape=jax.ShapeDtypeStruct(flat.shape, x.dtype),
        grid_spec=pltpu.PrefetchScalarGridSpec(
            num_scalar_prefetch=1,
            grid=(n, pl.cdiv(total, tc)),
            in_specs=[pl.BlockSpec((1, tc),
                                   lambda b, j, keep_ref: (b, j))],
            out_specs=pl.BlockSpec((1, tc),
                                   lambda b, j, keep_ref: (b, j)),
        ),
        compiler_params=pltpu.CompilerParams(
            dimension_semantics=("parallel", "parallel")),
    )(keep, flat)
    return out.reshape(x.shape)


class DropPath:
    """Mirror of the PyTorch module (no learnable parameters)."""

    def __init__(self, drop_prob: float = 0.0, scale_by_keep: bool = True):
        self.drop_prob = drop_prob
        self.scale_by_keep = scale_by_keep
        self.training = True

    def __call__(self, x, key=None, seed: int = 0):
        return drop_path_pallas(x, self.drop_prob, self.training,
                                self.scale_by_keep, key=key, seed=seed)


def _check_samples(x, y, keep_prob):
    """Each sample must be either all-zero or x / keep_prob."""
    ok = True
    for i in range(x.shape[0]):
        yi = y[i]
        xi_scaled = x[i] / keep_prob
        is_zero = bool(jnp.allclose(yi, 0.0))
        is_scaled = bool(jnp.allclose(yi, xi_scaled, rtol=1e-5, atol=1e-5))
        ok = ok and (is_zero or is_scaled)
    return ok


if __name__ == "__main__":
    key = jax.random.PRNGKey(0)
    k1, k2 = jax.random.split(key)

    ok = True

    # --- lane-dense path: NCHW, batch=2, channels=4, spatial=16x16 ---------
    x = jax.random.normal(k1, (2, 4, 16, 16), dtype=jnp.float32)
    module = DropPath(drop_prob=0.5, scale_by_keep=True)
    module.training = True
    y = jax.block_until_ready(module(x, seed=1234))
    ok = ok and _check_samples(x, y, keep_prob=1.0 - module.drop_prob)

    # eval / drop_prob==0 path must be identity
    module.training = False
    y_eval = jax.block_until_ready(module(x))
    ok = ok and bool(jnp.array_equal(y_eval, x))

    # --- ragged path: per-sample features (3*5*7=105) not multiple of 128 --
    x2 = jax.random.normal(k2, (2, 3, 5, 7), dtype=jnp.float32)
    module2 = DropPath(drop_prob=0.25, scale_by_keep=True)
    module2.training = True
    y2 = jax.block_until_ready(module2(x2, seed=7))
    ok = ok and _check_samples(x2, y2, keep_prob=1.0 - module2.drop_prob)

    if ok:
        print("KERNEL_OK")
    else:
        raise SystemExit("DropPath kernel output mismatch")
</pallas_src>

<mosaic_0001>
module attributes {stable_mosaic.version = 11 : i64} {
  func.func @_drop_path_kernel(%arg0: i32, %arg1: i32, %arg2: memref<2xi32, #tpu.memory_space<smem>>, %arg3: memref<1x8x128xf32, #tpu.memory_space<vmem>>, %arg4: memref<1x8x128xf32, #tpu.memory_space<vmem>>) attributes {dimension_semantics = [#tpu.dimension_semantics<parallel>, #tpu.dimension_semantics<parallel>], iteration_bounds = array<i64: 2, 1>, scalar_prefetch = 1 : i64, scratch_operands = 0 : i64, tpu.core_type = #tpu.core_type<tc>, window_params = [{transform_indices = @transform_0, window_bounds = array<i64: 1, 8, 128>}, {transform_indices = @transform_1, window_bounds = array<i64: 1, 8, 128>}]} {
    %0 = arith.index_cast %arg0 : i32 to index
    %1 = memref.load %arg2[%0] : memref<2xi32, #tpu.memory_space<smem>>
    %c0_i32 = arith.constant 0 : i32
    %2 = arith.cmpi sgt, %1, %c0_i32 : i32
    %cst = arith.constant 2.000000e+00 : f32
    %cst_0 = arith.constant 0.000000e+00 : f32
    %3 = arith.select %2, %cst, %cst_0 : f32
    %c0 = arith.constant 0 : index
    %c0_1 = arith.constant 0 : index
    %c0_2 = arith.constant 0 : index
    %4 = vector.load %arg3[%c0, %c0_1, %c0_2] : memref<1x8x128xf32, #tpu.memory_space<vmem>>, vector<1x8x128xf32>
    %5 = vector.broadcast %3 : f32 to vector<1x8x128xf32>
    %6 = arith.mulf %4, %5 : vector<1x8x128xf32>
    %c0_3 = arith.constant 0 : index
    %c0_4 = arith.constant 0 : index
    %c0_5 = arith.constant 0 : index
    %7 = vector.load %arg4[%c0_3, %c0_4, %c0_5] : memref<1x8x128xf32, #tpu.memory_space<vmem>>, vector<1x8x128xf32>
    tpu.vector_store %arg4[%c0_3, %c0_4, %c0_5], %6 {strides = array<i32>} : memref<1x8x128xf32, #tpu.memory_space<vmem>>, vector<1x8x128xf32>,
    return
  }
  func.func @transform_0(%arg0: i32, %arg1: i32, %arg2: memref<2xi32, #tpu.memory_space<smem>>) -> (i32, i32, i32) {
    %c0_i32 = arith.constant 0 : i32
    %c0_i32_0 = arith.constant 0 : i32
    return %arg0, %arg1, %c0_i32 : i32, i32, i32
  }
  func.func @transform_1(%arg0: i32, %arg1: i32, %arg2: memref<2xi32, #tpu.memory_space<smem>>) -> (i32, i32, i32) {
    %c0_i32 = arith.constant 0 : i32
    %c0_i32_0 = arith.constant 0 : i32
    return %arg0, %arg1, %c0_i32 : i32, i32, i32
  }
}

</mosaic_0001>

<llo_original>
// kernel: tpu_custom_call.1
$region0: #{tpu_custom_call.1}
  #allocation0 [shape = 'u32[]', space=smem, size = 0x4, offset = 0x4, fixed_abs, tag = 'smem constant byte address 0x4 - core index']
  #allocation1 [shape = 'u32[72,128]{1,0:T(1,128)}', space=vmem, size = 0x9000, scoped, tag = 'internal scratch']
  #allocation2 [shape = 's32[1]{0}', space=sflag, size = 0x4, scoped, tag = 'scoped memory for tpu_custom_call.1']
  #allocation3 [shape = 'u8[512]{0}', space=smem, size = 0x200, scoped, tag = 'prefetched SMEM operand 0']
  %s0 = inlined_call_operand.hbm [shape: s32[2], index: 0, kind: input, shape index: {}]
  %s1 = inlined_call_operand.hbm [shape: f32[2,8,128], index: 1, kind: input, shape index: {}]
  %s2 = inlined_call_operand.hbm [shape: f32[2,8,128], index: 2, kind: output, shape index: {}]
  %s3 = sld [smem:[#allocation0]]
  $region41: #{tpu_custom_call.1} parent=0
    _
  %s5 = ssub.s32 1, %s3
  %s6 = scalar_select 0, %s5, %s3
  %s8 = sshll.u32 %s0, 4
  %s9 = int_to_ptr.hbm [resolvable:$true] %s8
  %11 = dma.hbm_to_smem %s9, 16, [#allocation3], [#allocation2]
  %13 = dma.done [#allocation2], 16
  %14 = sfence
  $region1: #{tpu_custom_call.1} parent=0
    #allocation4 [shape = 'u8[8192]{0}', space=vmem, size = 0x2000, scoped, tag = 'input window, operand 1']
    #allocation5 [shape = 's32[2]{0}', space=sflag, size = 0x8, scoped, tag = 'scoped memory for tpu_custom_call.1']
    #allocation6 [shape = 's32[2]{0}', space=sflag, size = 0x8, scoped, tag = 'scoped memory for tpu_custom_call.1']
    #allocation7 [shape = 'u8[8192]{0}', space=vmem, size = 0x2000, scoped, tag = 'output window, operand 0']
    %15 = vsyncpa [#allocation5], 0
    %s16 = scalar_lea.sflag [#allocation5], 1
    %17 = vsyncpa %s16, 0
    %18 = vsyncpa [#allocation6], 0
    %s19 = scalar_lea.sflag [#allocation6], 1
    %20 = vsyncpa %s19, 0
    loop: start=0, step=1, limit=4
    $region2: #{tpu_custom_call.1} parent=1 // loop_pre_header
      _
    $region3: #{tpu_custom_call.1} parent=1 // loop_header
      %s22 = sphi 0, %s26
      %p23 = scmp.ge.s32.totalorder %s22, 4
      %s29 = sphi 0, %s41
      %s30 = sphi 0, %s37
      %s31 = sphi 0, %s29
      %s32 = sphi 0, %s30
      %s33 = sphi 0, %s31
      %s34 = sphi 0, %s32
      %s46 = sphi 0, %s48
      %s49 = sphi 0, %s46
      %s50 = sphi 0, %s49
      %s66 = sphi 0, %s50
      %s74 = sphi 0, %s76
      %s77 = sphi 0, %s74
      %s78 = sphi 0, %s77
      %s94 = sphi 0, %s78
    $region4: #{tpu_custom_call.1} parent=1 // loop_header_branch
      %25 = sbr.rel (%p23) target = $region8
    $region5: #{tpu_custom_call.1} parent=1 // loop_body
      %s27 = ssub.s32 %s22, 1
      %s28 = ssub.s32 %s22, 2
      %s35 = sadd.s32 1, %s30
      %p36 = scmp.ge.s32.totalorder %s35, 1
      %s37 = scalar_select %p36, 0, %s35
      %s38 = sadd.s32 1, %s29
      %s39 = scalar_select %p36, %s38, %s29
      %p40 = scmp.ge.s32.totalorder %s39, 2
      %s41 = scalar_select %p40, 0, %s39
      %s42 = ssub.s32 %s29, %s41
      %s43 = ssub.s32 %s30, %s37
      %s44 = sor.u32 %s42, %s43
      %p45 = scmp.eq.s32.totalorder %s44, 0
      %s47 = sadd.s32 %s46, 1
      %s48 = scalar_select %p45, %s46, %s47
      %p51 = pneg %p45
      %p52 = scmp.eq.s32.totalorder %s22, 1
      %p53 = por %p51, %p52
      %p54 = scmp.ne.s32.totalorder %s46, %s49
      %p55 = scmp.eq.s32.totalorder %s22, 0
      %p56 = por %p54, %p55
      %p57 = scmp.ne.s32.totalorder %s46, %s49
      %p58 = scmp.eq.s32.totalorder %s27, 1
      %p59 = por %p57, %p58
      %p60 = scmp.ne.s32.totalorder %s49, %s50
      %p61 = scmp.eq.s32.totalorder %s27, 0
      %p62 = por %p60, %p61
      %p63 = scmp.ne.s32.totalorder %s49, %s50
      %p64 = scmp.eq.s32.totalorder %s28, 1
      %p65 = por %p63, %p64
      %p67 = scmp.ne.s32.totalorder %s50, %s66
      %p68 = scmp.eq.s32.totalorder %s28, 0
      %p69 = por %p67, %p68
      %s70 = ssub.s32 %s29, %s41
      %s71 = ssub.s32 %s30, %s37
      %s72 = sor.u32 %s70, %s71
      %p73 = scmp.eq.s32.totalorder %s72, 0
      %s75 = sadd.s32 %s74, 1
      %s76 = scalar_select %p73, %s74, %s75
      %p79 = pneg %p73
      %p80 = scmp.eq.s32.totalorder %s22, 1
      %p81 = por %p79, %p80
      %p82 = scmp.ne.s32.totalorder %s74, %s77
      %p83 = scmp.eq.s32.totalorder %s22, 0
      %p84 = por %p82, %p83
      %p85 = scmp.ne.s32.totalorder %s74, %s77
      %p86 = scmp.eq.s32.totalorder %s27, 1
      %p87 = por %p85, %p86
      %p88 = scmp.ne.s32.totalorder %s77, %s78
      %p89 = scmp.eq.s32.totalorder %s27, 0
      %p90 = por %p88, %p89
      %p91 = scmp.ne.s32.totalorder %s77, %s78
      %p92 = scmp.eq.s32.totalorder %s28, 1
      %p93 = por %p91, %p92
      %p95 = scmp.ne.s32.totalorder %s78, %s94
      %p96 = scmp.eq.s32.totalorder %s28, 0
      %p97 = por %p95, %p96
      %p98 = scmp.le.s32.totalorder 1, %s22
      %p99 = scmp.lt.s32.totalorder %s22, 3
      %p100 = pnand %p98, %p99
      %p101 = pneg %p100
      // Predicated region
      $region9: #{tpu_custom_call.1} parent=5 // pred_check
        _
      $region10: #{tpu_custom_call.1} parent=5 // pred_check_branch
        %103 = sbr.rel (%p100) target = $region12
      $region11: #{tpu_custom_call.1} parent=5 // pred_region
        %s104 = ssub.s32 %s22, 1
      $region12: #{tpu_custom_call.1} parent=5 // pred_fallthru
        _
      %p105 = scmp.lt.s32.totalorder %s22, 2
      // Predicated region
      $region13: #{tpu_custom_call.1} parent=5 // pred_check
        %p106 = pneg %p105
      $region14: #{tpu_custom_call.1} parent=5 // pred_check_branch
        %108 = sbr.rel (%p106) target = $region16
      $region15: #{tpu_custom_call.1} parent=5 // pred_region
        // Predicated region
        $region17: #{tpu_custom_call.1} parent=15 // pred_check
          %p109 = pneg %p56
        $region18: #{tpu_custom_call.1} parent=15 // pred_check_branch
          %111 = sbr.rel (%p109) target = $region20
        $region19: #{tpu_custom_call.1} parent=15 // pred_region
          %s112 = sand.u32 %s46, 1
          %s113 = scalar_lea.sflag [#allocation5], %s112
          %s114 = sand.u32 %s46, 1
          %s115 = smul.addr %s114, 8
          %s116 = scalar_lea.vmem [#allocation4], %s115
          %118 = vsyncadd %s113, 0
          %s119 = sadd.s32 %s30, %s29
          %s120 = smul.addr %s119, 8
          %s121 = scalar_lea.hbm %s1, %s120
          %s123 = sshll.u32 %s121, 4
          %s124 = int_to_ptr.hbm [resolvable:$true] %s123
          %s125 = sshll.u32 %s116, 4
          %s126 = int_to_ptr.vmem [resolvable:$true] %s125
          %128 = dma.hbm_to_vmem [thread:$0]  %s124, 128, %s126, %s113
        $region20: #{tpu_custom_call.1} parent=15 // pred_fallthru
          _
      $region16: #{tpu_custom_call.1} parent=5 // pred_fallthru
        _
      %p129 = scmp.le.s32.totalorder 1, %s22
      %p130 = scmp.lt.s32.totalorder %s22, 3
      %p131 = pnand %p129, %p130
      %p132 = pneg %p131
      // Predicated region
      $region21: #{tpu_custom_call.1} parent=5 // pred_check
        _
      $region22: #{tpu_custom_call.1} parent=5 // pred_check_branch
        %134 = sbr.rel (%p131) target = $region24
      $region23: #{tpu_custom_call.1} parent=5 // pred_region
        %s135 = ssub.s32 %s22, 1
        %s136 = sand.u32 %s49, 1
        %s137 = scalar_lea.sflag [#allocation5], %s136
        %s138 = sand.u32 %s49, 1
        %s139 = smul.addr %s138, 8
        %s140 = scalar_lea.vmem [#allocation4], %s139
        // Predicated region
        $region25: #{tpu_custom_call.1} parent=23 // pred_check
          %p141 = pneg %p62
        $region26: #{tpu_custom_call.1} parent=23 // pred_check_branch
          %143 = sbr.rel (%p141) target = $region28
        $region27: #{tpu_custom_call.1} parent=23 // pred_region
          %145 = dma.done %s137, 128
        $region28: #{tpu_custom_call.1} parent=23 // pred_fallthru
          _
        %s146 = sand.u32 %s49, 1
        %s147 = scalar_lea.sflag [#allocation5], %s146
        %s148 = sand.u32 %s49, 1
        %s149 = smul.addr %s148, 8
        %s150 = scalar_lea.vmem [#allocation4], %s149
        %p151 = pneg %p62
        %p152 = pneg %p59
        %p153 = pneg %p90
        %p154 = pneg %p87
        %s155 = sand.u32 %s77, 1
        %s156 = scalar_lea.sflag [#allocation6], %s155
        %s157 = sand.u32 %s77, 1
        %s158 = smul.addr %s157, 8
        %s159 = scalar_lea.vmem [#allocation7], %s158
        %s160 = sld [smem:[#allocation3 + %s31]]
        %p161 = scmp.gt.s32.totalorder %s160, 0
        %s162 = scalar_select %p161, 2.0, 0.0
        %v163 = vld [vmem:[%s140] sm:$0xff]
        %v164 = vstv %s162
        %v165 = vmul.f32 %v163, %v164
        %166 = vst [vmem:[%s159] sm:$0xff] %v165
        %s167 = sand.u32 %s77, 1
        %s168 = scalar_lea.sflag [#allocation6], %s167
        %s169 = sand.u32 %s77, 1
        %s170 = smul.addr %s169, 8
        %s171 = scalar_lea.vmem [#allocation7], %s170
        // Predicated region
        $region29: #{tpu_custom_call.1} parent=23 // pred_check
          %p172 = pneg %p87
        $region30: #{tpu_custom_call.1} parent=23 // pred_check_branch
          %174 = sbr.rel (%p172) target = $region32
        $region31: #{tpu_custom_call.1} parent=23 // pred_region
          %176 = vsyncadd %s168, 0
          %s177 = sadd.s32 %s32, %s31
          %s178 = smul.addr %s177, 8
          %s179 = scalar_lea.hbm %s2, %s178
          %s181 = sshll.u32 %s171, 4
          %s182 = int_to_ptr.vmem [resolvable:$true] %s181
          %s183 = sshll.u32 %s179, 4
          %s184 = int_to_ptr.hbm [resolvable:$true] %s183
          %186 = dma.vmem_to_hbm [thread:$0]  %s182, 128, %s184, %s168
        $region32: #{tpu_custom_call.1} parent=23 // pred_fallthru
          _
      $region24: #{tpu_custom_call.1} parent=5 // pred_fallthru
        _
      %p187 = scmp.le.s32.totalorder 2, %s22
      // Predicated region
      $region33: #{tpu_custom_call.1} parent=5 // pred_check
        %p188 = pneg %p187
      $region34: #{tpu_custom_call.1} parent=5 // pred_check_branch
        %190 = sbr.rel (%p188) target = $region36
      $region35: #{tpu_custom_call.1} parent=5 // pred_region
        %s191 = ssub.s32 %s22, 2
        // Predicated region
        $region37: #{tpu_custom_call.1} parent=35 // pred_check
          %p192 = pneg %p93
        $region38: #{tpu_custom_call.1} parent=35 // pred_check_branch
          %194 = sbr.rel (%p192) target = $region40
        $region39: #{tpu_custom_call.1} parent=35 // pred_region
          %s195 = sand.u32 %s78, 1
          %s196 = scalar_lea.sflag [#allocation6], %s195
          %s197 = sand.u32 %s78, 1
          %s198 = smul.addr %s197, 8
          %s199 = scalar_lea.vmem [#allocation7], %s198
          %201 = dma.done %s196, 128
        $region40: #{tpu_custom_call.1} parent=35 // pred_fallthru
          _
      $region36: #{tpu_custom_call.1} parent=5 // pred_fallthru
        _
    $region6: #{tpu_custom_call.1} parent=1 // loop_footer
      %s26 = sadd.s32 1, %s22
    $region7: #{tpu_custom_call.1} parent=1 // loop_footer_branch
      %21 = sbr.rel target = $region3
    $region8: #{tpu_custom_call.1} parent=1 // loop_exit
      _
    %202 = vsyncpa [#allocation5], 1
    %s203 = scalar_lea.sflag [#allocation5], 1
    %204 = vsyncpa %s203, 1
    %205 = vsyncpa [#allocation6], 1
    %s206 = scalar_lea.sflag [#allocation6], 1
    %207 = vsyncpa %s206, 1

</llo_original>
